<compile_context>
chip_gen: v7x
topology: tpu7x:2x2x1
jax: 0.10.0
libtpu: 0.0.40
codegen_flags: <defaults>
</compile_context>

<pallas_src>
import math

import jax
import jax.numpy as jnp
from jax.experimental import pallas as pl
from jax.experimental.pallas import tpu as pltpu

_LANE = 128
_SUBLANE = 8


def _round_up(x, m):
    return ((x + m - 1) // m) * m


def _pad2d(a, rows, cols):
    return jnp.pad(a, ((0, rows - a.shape[0]), (0, cols - a.shape[1])))


def _mlp_kernel(x_ref, w1_ref, w2_ref, w3_ref, b12_ref, b3_ref, o_ref):
    cd = w1_ref.dtype  # compute dtype (bf16): MXU operands; accumulation in f32
    # Layer 1: cast x in-kernel (VPU, hidden under DMA); K = n_in (MXU masks the
    # ragged contraction remainder, padded hidden columns are exact zeros).
    x = x_ref[...].astype(cd)
    h1 = jnp.dot(x, w1_ref[...], preferred_element_type=jnp.float32)
    h1 = jnp.maximum(h1 + b12_ref[0:1, :], 0.0).astype(cd)
    # Layer 2 (hid_p x hid_p, fully lane-aligned)
    h2 = jnp.dot(h1, w2_ref[...], preferred_element_type=jnp.float32)
    h2 = jnp.maximum(h2 + b12_ref[1:2, :], 0.0).astype(cd)
    # Layer 3 (no activation); N = n_out, written directly (no padded columns)
    out = jnp.dot(h2, w3_ref[...], preferred_element_type=jnp.float32)
    o_ref[...] = (out + b3_ref[...]).astype(o_ref.dtype)


def prepare_general_nn_params(params, compute_dtype=jnp.bfloat16):
    """Pad/cast weights ONCE (hoisted out of the per-call path).

    params: dict with w1 (n_in, H), b1 (1, H) or (H,), w2 (H, H), b2,
            w3 (H, n_out), b3 -- unpadded, float32.
    Only the hidden dimension is padded to a 128-lane multiple; the padded
    weight rows/cols and bias lanes are zeros, so padded hidden units are
    ReLU(0) = 0 and contribute nothing downstream (exact).
    """
    n_in, hidden = params["w1"].shape
    n_out = params["w3"].shape[1]
    hid_p = _round_up(hidden, _LANE)

    w1 = _pad2d(params["w1"], n_in, hid_p).astype(compute_dtype)   # (n_in, hid_p)
    w2 = _pad2d(params["w2"], hid_p, hid_p).astype(compute_dtype)  # (hid_p, hid_p)
    w3 = _pad2d(params["w3"], hid_p, n_out).astype(compute_dtype)  # (hid_p, n_out)
    b1 = _pad2d(params["b1"].reshape(1, -1).astype(jnp.float32), 1, hid_p)
    b2 = _pad2d(params["b2"].reshape(1, -1).astype(jnp.float32), 1, hid_p)
    b12 = jnp.concatenate([b1, b2], axis=0)                        # (2, hid_p) f32
    b3 = params["b3"].reshape(1, -1).astype(jnp.float32)           # (1, n_out) f32
    return {"w1": w1, "w2": w2, "w3": w3, "b12": b12, "b3": b3}


def general_nn_forward(x, prepared, *, tm=1024):
    """Forward pass of GeneralNN as a single fused Pallas kernel.

    x        : (batch, n_in) float32 (natural layout; no host-side pad/cast)
    prepared : output of prepare_general_nn_params (padded bf16 weights)
    returns  : (batch, n_out) float32  (== torch .view(B, -1) for 2-D input)
    """
    batch, n_in = x.shape
    w1, w2, w3 = prepared["w1"], prepared["w2"], prepared["w3"]
    b12, b3 = prepared["b12"], prepared["b3"]
    assert n_in == w1.shape[0], "x feature dim does not match w1"
    hid_p = w1.shape[1]
    n_out = w3.shape[1]

    # Batch tile: multiple of 8 sublanes; capped at ceil(B/2) (rounded to 8) so
    # the grid always has >=2 steps when B > 8 (v7x megacore sharding), and at
    # `tm` to bound VMEM and amortize the ~0.35us/step pipeline overhead.
    half = _round_up(max(pl.cdiv(batch, 2), 1), _SUBLANE)
    tm_eff = max(_SUBLANE, min(tm, half))
    grid = (pl.cdiv(batch, tm_eff),)  # ragged last block handled by Pallas

    resident = lambda a: pl.BlockSpec(a.shape, lambda i: (0, 0))

    cost = pl.CostEstimate(
        flops=2 * batch * (n_in * hid_p + hid_p * hid_p + hid_p * n_out),
        transcendentals=0,
        bytes_accessed=(batch * n_in * 4                      # x in (f32)
                        + batch * n_out * 4                   # out (f32)
                        + (n_in * hid_p + hid_p * hid_p + hid_p * n_out) * 2
                        + (2 * hid_p + n_out) * 4),
    )

    out = pl.pallas_call(
        _mlp_kernel,
        out_shape=jax.ShapeDtypeStruct((batch, n_out), jnp.float32),
        grid=grid,
        in_specs=[
            pl.BlockSpec((tm_eff, n_in), lambda i: (i, 0)),   # x: tiled on batch
            resident(w1), resident(w2), resident(w3),
            resident(b12), resident(b3),
        ],
        out_specs=pl.BlockSpec((tm_eff, n_out), lambda i: (i, 0)),
        compiler_params=pltpu.CompilerParams(
            dimension_semantics=("parallel",)),
        cost_estimate=cost,
    )(x, w1, w2, w3, b12, b3)

    # torch's x.view(x.size(0), -1) is a no-op for 2-D input.
    return out


def init_general_nn_params(key, n_in_input, n_in_state, n_out, prob=True,
                           hidden_w=32, ang_trans_idx=()):
    """Deterministic init mimicking PyTorch nn.Linear default
    (uniform(-1/sqrt(fan_in), 1/sqrt(fan_in)) for weight and bias)."""
    n_in = n_in_input + n_in_state + len(ang_trans_idx)
    n_out_eff = n_out + len(ang_trans_idx)
    if prob:
        n_out_eff *= 2

    dims = [(n_in, hidden_w), (hidden_w, hidden_w), (hidden_w, n_out_eff)]
    params = {}
    for i, (fan_in, fan_out) in enumerate(dims, start=1):
        key, kw, kb = jax.random.split(key, 3)
        bound = 1.0 / math.sqrt(fan_in)
        params[f"w{i}"] = jax.random.uniform(
            kw, (fan_in, fan_out), jnp.float32, -bound, bound)
        params[f"b{i}"] = jax.random.uniform(
            kb, (1, fan_out), jnp.float32, -bound, bound)
    return params, n_in, n_out_eff


def _reference_forward_matched(x, prepared):
    """Pure-JAX reference mirroring the kernel's bf16-operand / f32-acc scheme."""
    cd = prepared["w1"].dtype
    h1 = jnp.dot(x.astype(cd), prepared["w1"], preferred_element_type=jnp.float32)
    h1 = jnp.maximum(h1 + prepared["b12"][0:1, :], 0.0).astype(cd)
    h2 = jnp.dot(h1, prepared["w2"], preferred_element_type=jnp.float32)
    h2 = jnp.maximum(h2 + prepared["b12"][1:2, :], 0.0).astype(cd)
    out = jnp.dot(h2, prepared["w3"], preferred_element_type=jnp.float32)
    return out + prepared["b3"]


def _reference_forward_f32(x, params):
    """Pure-f32 reference (matches the original PyTorch GeneralNN.forward)."""
    hi = jax.lax.Precision.HIGHEST
    h1 = jnp.maximum(jnp.dot(x, params["w1"], precision=hi)
                     + params["b1"].reshape(1, -1), 0.0)
    h2 = jnp.maximum(jnp.dot(h1, params["w2"], precision=hi)
                     + params["b2"].reshape(1, -1), 0.0)
    return jnp.dot(h2, params["w3"], precision=hi) + params["b3"].reshape(1, -1)


if __name__ == "__main__":
    # Module-consistent small shapes:
    #   n_in_input=4 (motor commands), n_in_state=8, n_out=8, prob=True -> 16 outputs
    key = jax.random.PRNGKey(0)
    key, kx1, kx2 = jax.random.split(key, 3)

    n_in_input, n_in_state, n_out_base, hidden_w = 4, 8, 8, 32
    params, n_in, n_out = init_general_nn_params(
        key, n_in_input, n_in_state, n_out_base, prob=True, hidden_w=hidden_w)

    # Weight pad/cast hoisted out of the per-call path (done once).
    prepared = prepare_general_nn_params(params)

    fwd = jax.jit(general_nn_forward)

    # batch=8: single tile; batch=50: 2-step grid with a ragged (masked) last block.
    for kx, batch in ((kx1, 8), (kx2, 50)):
        x = jax.random.normal(kx, (batch, n_in), jnp.float32)
        y = jax.block_until_ready(fwd(x, prepared))
        assert y.shape == (batch, n_out)

        y_bf16 = _reference_forward_matched(x, prepared)
        assert jnp.allclose(y, y_bf16, atol=5e-3, rtol=5e-3), \
            "mismatch vs matched bf16 reference"

        y_f32 = _reference_forward_f32(x, params)
        assert jnp.allclose(y, y_f32, atol=5e-2, rtol=5e-2), \
            "mismatch vs pure-f32 PyTorch-equivalent reference"

    print("KERNEL_OK")
</pallas_src>

<mosaic_0001>
module attributes {stable_mosaic.version = 11 : i64} {
  func.func @_mlp_kernel(%arg0: i32, %arg1: memref<8x12xf32, #tpu.memory_space<vmem>>, %arg2: memref<12x128xbf16, #tpu.memory_space<vmem>>, %arg3: memref<128x128xbf16, #tpu.memory_space<vmem>>, %arg4: memref<128x16xbf16, #tpu.memory_space<vmem>>, %arg5: memref<2x128xf32, #tpu.memory_space<vmem>>, %arg6: memref<1x16xf32, #tpu.memory_space<vmem>>, %arg7: memref<8x16xf32, #tpu.memory_space<vmem>>) attributes {dimension_semantics = [#tpu.dimension_semantics<parallel>], iteration_bounds = array<i64: 1>, scalar_prefetch = 0 : i64, scratch_operands = 0 : i64, tpu.core_type = #tpu.core_type<tc>, window_params = [{transform_indices = @transform_0, window_bounds = array<i64: 8, 12>}, {pipeline_mode = #tpu.pipeline_mode<synchronous>, transform_indices = @transform_1, window_bounds = array<i64: 12, 128>}, {pipeline_mode = #tpu.pipeline_mode<synchronous>, transform_indices = @transform_2, window_bounds = array<i64: 128, 128>}, {pipeline_mode = #tpu.pipeline_mode<synchronous>, transform_indices = @transform_3, window_bounds = array<i64: 128, 16>}, {pipeline_mode = #tpu.pipeline_mode<synchronous>, transform_indices = @transform_4, window_bounds = array<i64: 2, 128>}, {pipeline_mode = #tpu.pipeline_mode<synchronous>, transform_indices = @transform_5, window_bounds = array<i64: 1, 16>}, {transform_indices = @transform_6, window_bounds = array<i64: 8, 16>}]} {
    %c0 = arith.constant 0 : index
    %c0_0 = arith.constant 0 : index
    %0 = vector.load %arg1[%c0, %c0_0] : memref<8x12xf32, #tpu.memory_space<vmem>>, vector<8x12xf32>
    %1 = arith.truncf %0 : vector<8x12xf32> to vector<8x12xbf16>
    %c0_1 = arith.constant 0 : index
    %c0_2 = arith.constant 0 : index
    %2 = vector.load %arg2[%c0_1, %c0_2] : memref<12x128xbf16, #tpu.memory_space<vmem>>, vector<12x128xbf16>
    %cst = arith.constant dense<0.000000e+00> : vector<8x128xf32>
    %3 = tpu.matmul %1, %2, %cst {dimension_numbers = #tpu.dot_dimension_numbers<[1], [0], [0], [1], [0, 0, 1, 1], [], []>} : vector<8x12xbf16>, vector<12x128xbf16>, vector<8x128xf32> -> vector<8x128xf32>
    %c0_3 = arith.constant 0 : index
    %c0_4 = arith.constant 0 : index
    %4 = vector.load %arg5[%c0_3, %c0_4] : memref<2x128xf32, #tpu.memory_space<vmem>>, vector<1x128xf32>
    %5 = vector.broadcast %4 : vector<1x128xf32> to vector<8x128xf32>
    %6 = arith.addf %3, %5 : vector<8x128xf32>
    %cst_5 = arith.constant 0.000000e+00 : f32
    %7 = vector.broadcast %cst_5 : f32 to vector<8x128xf32>
    %8 = arith.maximumf %6, %7 : vector<8x128xf32>
    %9 = arith.truncf %8 : vector<8x128xf32> to vector<8x128xbf16>
    %c0_6 = arith.constant 0 : index
    %c0_7 = arith.constant 0 : index
    %10 = vector.load %arg3[%c0_6, %c0_7] : memref<128x128xbf16, #tpu.memory_space<vmem>>, vector<128x128xbf16>
    %cst_8 = arith.constant dense<0.000000e+00> : vector<8x128xf32>
    %11 = tpu.matmul %9, %10, %cst_8 {dimension_numbers = #tpu.dot_dimension_numbers<[1], [0], [0], [1], [0, 0, 1, 1], [], []>} : vector<8x128xbf16>, vector<128x128xbf16>, vector<8x128xf32> -> vector<8x128xf32>
    %c1 = arith.constant 1 : index
    %c0_9 = arith.constant 0 : index
    %12 = vector.load %arg5[%c1, %c0_9] : memref<2x128xf32, #tpu.memory_space<vmem>>, vector<1x128xf32>
    %13 = vector.broadcast %12 : vector<1x128xf32> to vector<8x128xf32>
    %14 = arith.addf %11, %13 : vector<8x128xf32>
    %cst_10 = arith.constant 0.000000e+00 : f32
    %15 = vector.broadcast %cst_10 : f32 to vector<8x128xf32>
    %16 = arith.maximumf %14, %15 : vector<8x128xf32>
    %17 = arith.truncf %16 : vector<8x128xf32> to vector<8x128xbf16>
    %c0_11 = arith.constant 0 : index
    %c0_12 = arith.constant 0 : index
    %18 = vector.load %arg4[%c0_11, %c0_12] : memref<128x16xbf16, #tpu.memory_space<vmem>>, vector<128x16xbf16>
    %cst_13 = arith.constant dense<0.000000e+00> : vector<8x16xf32>
    %19 = tpu.matmul %17, %18, %cst_13 {dimension_numbers = #tpu.dot_dimension_numbers<[1], [0], [0], [1], [0, 0, 1, 1], [], []>} : vector<8x128xbf16>, vector<128x16xbf16>, vector<8x16xf32> -> vector<8x16xf32>
    %c0_14 = arith.constant 0 : index
    %c0_15 = arith.constant 0 : index
    %20 = vector.load %arg6[%c0_14, %c0_15] : memref<1x16xf32, #tpu.memory_space<vmem>>, vector<1x16xf32>
    %21 = vector.broadcast %20 : vector<1x16xf32> to vector<8x16xf32>
    %22 = arith.addf %19, %21 : vector<8x16xf32>
    %c0_16 = arith.constant 0 : index
    %c0_17 = arith.constant 0 : index
    %23 = vector.load %arg7[%c0_16, %c0_17] : memref<8x16xf32, #tpu.memory_space<vmem>>, vector<8x16xf32>
    tpu.vector_store %arg7[%c0_16, %c0_17], %22 {strides = array<i32>} : memref<8x16xf32, #tpu.memory_space<vmem>>, vector<8x16xf32>,
    return
  }
  func.func @transform_0(%arg0: i32) -> (i32, i32) {
    %c0_i32 = arith.constant 0 : i32
    %c0_i32_0 = arith.constant 0 : i32
    return %arg0, %c0_i32 : i32, i32
  }
  func.func @transform_1(%arg0: i32) -> (i32, i32) {
    %c0_i32 = arith.constant 0 : i32
    %c0_i32_0 = arith.constant 0 : i32
    %c0_i32_1 = arith.constant 0 : i32
    return %c0_i32, %c0_i32_0 : i32, i32
  }
  func.func @transform_2(%arg0: i32) -> (i32, i32) {
    %c0_i32 = arith.constant 0 : i32
    %c0_i32_0 = arith.constant 0 : i32
    %c0_i32_1 = arith.constant 0 : i32
    return %c0_i32, %c0_i32_0 : i32, i32
  }
  func.func @transform_3(%arg0: i32) -> (i32, i32) {
    %c0_i32 = arith.constant 0 : i32
    %c0_i32_0 = arith.constant 0 : i32
    %c0_i32_1 = arith.constant 0 : i32
    return %c0_i32, %c0_i32_0 : i32, i32
  }
  func.func @transform_4(%arg0: i32) -> (i32, i32) {
    %c0_i32 = arith.constant 0 : i32
    %c0_i32_0 = arith.constant 0 : i32
    %c0_i32_1 = arith.constant 0 : i32
    return %c0_i32, %c0_i32_0 : i32, i32
  }
  func.func @transform_5(%arg0: i32) -> (i32, i32) {
    %c0_i32 = arith.constant 0 : i32
    %c0_i32_0 = arith.constant 0 : i32
    %c0_i32_1 = arith.constant 0 : i32
    return %c0_i32, %c0_i32_0 : i32, i32
  }
  func.func @transform_6(%arg0: i32) -> (i32, i32) {
    %c0_i32 = arith.constant 0 : i32
    %c0_i32_0 = arith.constant 0 : i32
    return %arg0, %c0_i32 : i32, i32
  }
}

</mosaic_0001>

<llo_original>
// kernel: general_nn_forward.1
$region0: #{general_nn_forward.1}
  #allocation0 [shape = 'u32[]', space=smem, size = 0x4, offset = 0x4, fixed_abs, tag = 'smem constant byte address 0x4 - core index']
  #allocation1 [shape = 'u32[144,128]{1,0:T(1,128)}', space=vmem, size = 0x12000, scoped, tag = 'internal scratch']
  %s0 = inlined_call_operand.vmem [shape: f32[8,12], index: 0, kind: input, shape index: {}]
  %s1 = inlined_call_operand.vmem [shape: bf16[12,128], index: 1, kind: input, shape index: {}]
  %s2 = inlined_call_operand.vmem [shape: bf16[128,128], index: 2, kind: input, shape index: {}]
  %s3 = inlined_call_operand.vmem [shape: bf16[128,16], index: 3, kind: input, shape index: {}]
  %s4 = inlined_call_operand.vmem [shape: f32[2,128], index: 4, kind: input, shape index: {}]
  %s5 = inlined_call_operand.hbm [shape: f32[1,16], index: 5, kind: input, shape index: {}]
  %s6 = inlined_call_operand.hbm [shape: f32[8,16], index: 6, kind: output, shape index: {}]
  %s7 = sld [smem:[#allocation0]]
  $region38: #{general_nn_forward.1} parent=0
    _
  %s9 = ssub.s32 1, %s7
  %s10 = scalar_select 0, %s9, %s7
  $region1: #{general_nn_forward.1} parent=0
    #allocation2 [shape = 'u8[512]{0}', space=vmem, size = 0x400, scoped, tag = 'input window, operand 5, single buffered']
    #allocation3 [shape = 's32[1]{0}', space=sflag, size = 0x4, scoped, tag = 'scoped memory for general_nn_forward.1']
    #allocation4 [shape = 's32[1]{0}', space=sflag, size = 0x4, scoped, tag = 'scoped memory for general_nn_forward.1']
    #allocation5 [shape = 'u8[4096]{0}', space=vmem, size = 0x1000, scoped, tag = 'output window, operand 0, single buffered']
    %11 = vsyncpa [#allocation3], 0
    %12 = vsyncpa [#allocation4], 0
    // Predicated region
    $region2: #{general_nn_forward.1} parent=1 // pred_check
      _
    $region3: #{general_nn_forward.1} parent=1 // pred_check_branch
      %14 = sbr.rel (0) target = $region5
    $region4: #{general_nn_forward.1} parent=1 // pred_region
      _
    $region5: #{general_nn_forward.1} parent=1 // pred_fallthru
      _
    // Predicated region
    $region6: #{general_nn_forward.1} parent=1 // pred_check
      _
    $region7: #{general_nn_forward.1} parent=1 // pred_check_branch
      %16 = sbr.rel (0) target = $region9
    $region8: #{general_nn_forward.1} parent=1 // pred_region
      _
    $region9: #{general_nn_forward.1} parent=1 // pred_fallthru
      _
    // Predicated region
    $region10: #{general_nn_forward.1} parent=1 // pred_check
      _
    $region11: #{general_nn_forward.1} parent=1 // pred_check_branch
      %18 = sbr.rel (0) target = $region13
    $region12: #{general_nn_forward.1} parent=1 // pred_region
      _
    $region13: #{general_nn_forward.1} parent=1 // pred_fallthru
      _
    // Predicated region
    $region14: #{general_nn_forward.1} parent=1 // pred_check
      _
    $region15: #{general_nn_forward.1} parent=1 // pred_check_branch
      %20 = sbr.rel (0) target = $region17
    $region16: #{general_nn_forward.1} parent=1 // pred_region
      _
    $region17: #{general_nn_forward.1} parent=1 // pred_fallthru
      _
    // Predicated region
    $region18: #{general_nn_forward.1} parent=1 // pred_check
      _
    $region19: #{general_nn_forward.1} parent=1 // pred_check_branch
      %22 = sbr.rel (0) target = $region21
    $region20: #{general_nn_forward.1} parent=1 // pred_region
      _
    $region21: #{general_nn_forward.1} parent=1 // pred_fallthru
      _
    // Predicated region
    $region22: #{general_nn_forward.1} parent=1 // pred_check
      _
    $region23: #{general_nn_forward.1} parent=1 // pred_check_branch
      %24 = sbr.rel (0) target = $region25
    $region24: #{general_nn_forward.1} parent=1 // pred_region
      %s26 = ssub.s32 16, 16
      %27 = vsyncadd [#allocation3], %s26
      %s29 = sshll.u32 [#allocation2], 4
      %s30 = int_to_ptr.vmem [resolvable:$true] %s29
      %32 = dma.hbm_to_vmem [thread:$0]  %s5, 16, %s30, [#allocation3]
    $region25: #{general_nn_forward.1} parent=1 // pred_fallthru
      _
    // Predicated region
    $region26: #{general_nn_forward.1} parent=1 // pred_check
      _
    $region27: #{general_nn_forward.1} parent=1 // pred_check_branch
      %34 = sbr.rel (0) target = $region29
    $region28: #{general_nn_forward.1} parent=1 // pred_region
      %35 = dma.done [#allocation3], 16
    $region29: #{general_nn_forward.1} parent=1 // pred_fallthru
      _
    %v37 = vld [vmem:[%s0] sm:$0xff]
    %v38 = vpack.c.bf16 %v37, %v37
    %v39 = vld [vmem:[%s1] sm:$0xf]
    %v40 = vld [vmem:[%s1 + $0x4] sm:$0x3]
    %v41 = vld [vmem:[%s4] sm:$0x1]
    %v42 = vlaneseq
    %v43 = vshrl.u32 %v42, 7
    %v44 = vsub.s32 0, %v43
    %v45 = vrot.slane %v41, %v44
    %v48 = vunpack.c.l.b16 %v39
    %v49 = vunpack.c.l.b16 %v40
    %v50 = vpack.c.b16 %v49, %v48
    %vm51 = vcmask 97280
    %v53 = vsel %vm51, %v38, 0
    %vm55 = vcmask 1045504
    %v57 = vsel %vm55, %v50, 0
    %59 = vmatprep.subr.bf16.mxu0 0
    %60 = vmatpush1.bf16.msra.mxu0 %v57
    %61 = vmatprep.subr.bf16.mxu0 0
    %62 = vmatpush1.bf16.msra.mxu0 0
    %63 = vmatprep.subr.bf16.mxu0 0
    %64 = vmatpush1.bf16.msra.mxu0 0
    %65 = vmatprep.subr.bf16.mxu0 0
    %66 = vmatpush1.bf16.msra.mxu0 0
    %67 = vmatprep.subr.bf16.mxu0 0
    %68 = vmatpush1.bf16.msra.mxu0 0
    %69 = vmatprep.subr.bf16.mxu0 0
    %70 = vmatpush1.bf16.msra.mxu0 0
    %71 = vmatprep.subr.bf16.mxu0 0
    %72 = vmatpush1.bf16.msra.mxu0 0
    %73 = vmatprep.subr.bf16.mxu0 0
    %74 = vmatpush1.bf16.msra.mxu0 0
    %75 = vmatprep.subr.bf16.mxu0 0
    %76 = vmatpush1.bf16.msra.mxu0 0
    %77 = vmatprep.subr.bf16.mxu0 0
    %78 = vmatpush1.bf16.msra.mxu0 0
    %79 = vmatprep.subr.bf16.mxu0 0
    %80 = vmatpush1.bf16.msra.mxu0 0
    %81 = vmatprep.subr.bf16.mxu0 0
    %82 = vmatpush1.bf16.msra.mxu0 0
    %83 = vmatprep.subr.bf16.mxu0 0
    %84 = vmatpush1.bf16.msra.mxu0 0
    %85 = vmatprep.subr.bf16.mxu0 0
    %86 = vmatpush1.bf16.msra.mxu0 0
    %87 = vmatprep.subr.bf16.mxu0 0
    %88 = vmatpush1.bf16.msra.mxu0 0
    %89 = vmatprep.subr.bf16.mxu0 0
    %90 = vmatpush1.bf16.msra.mxu0 0
    %91 = vmatprep.mubr.bf16.mxu0 0
    %92 = vmatmul.mubr.bf16.gmra.mrb[0].mxu0 %v53
    %v93 = vpop.f32.mrb[0].mxu0
    %v94 = vadd.f32 %v45, %v93
    %v95 = vpop.f32.mrb[0].mxu0
    %v96 = vpop.f32.mrb[0].mxu0
    %v97 = vpop.f32.mrb[0].mxu0
    %98 = vdwg.mxu0
    %v99 = vmax.f32 %v94, 0.0
    %v100 = vpack.c.bf16 %v99, %v99
    %v101 = vld [vmem:[%s2] sm:$0xf]
    %v102 = vld [vmem:[%s2 + $0x4] sm:$0xf]
    %v103 = vld [vmem:[%s2 + $0x8] sm:$0xf]
    %v104 = vld [vmem:[%s2 + $0xc] sm:$0xf]
    %v105 = vld [vmem:[%s2 + $0x10] sm:$0xf]
    %v106 = vld [vmem:[%s2 + $0x14] sm:$0xf]
    %v107 = vld [vmem:[%s2 + $0x18] sm:$0xf]
    %v108 = vld [vmem:[%s2 + $0x1c] sm:$0xf]
    %v109 = vld [vmem:[%s2 + $0x20] sm:$0xf]
    %v110 = vld [vmem:[%s2 + $0x24] sm:$0xf]
    %v111 = vld [vmem:[%s2 + $0x28] sm:$0xf]
    %v112 = vld [vmem:[%s2 + $0x2c] sm:$0xf]
    %v113 = vld [vmem:[%s2 + $0x30] sm:$0xf]
    %v114 = vld [vmem:[%s2 + $0x34] sm:$0xf]
    %v115 = vld [vmem:[%s2 + $0x38] sm:$0xf]
    %v116 = vld [vmem:[%s2 + $0x3c] sm:$0xf]
    %v117 = vld [vmem:[%s4 + $0x1] sm:$0x1]
    %v118 = vlaneseq
    %v119 = vshrl.u32 %v118, 7
    %v120 = vsub.s32 0, %v119
    %v121 = vrot.slane %v117, %v120
    %v138 = vunpack.c.l.b16 %v101
    %v139 = vunpack.c.l.b16 %v102
    %v140 = vunpack.c.l.b16 %v103
    %v141 = vunpack.c.l.b16 %v104
    %v142 = vunpack.c.l.b16 %v105
    %v143 = vunpack.c.l.b16 %v106
    %v144 = vunpack.c.l.b16 %v107
    %v145 = vunpack.c.l.b16 %v108
    %v146 = vunpack.c.l.b16 %v109
    %v147 = vunpack.c.l.b16 %v110
    %v148 = vunpack.c.l.b16 %v111
    %v149 = vunpack.c.l.b16 %v112
    %v150 = vunpack.c.l.b16 %v113
    %v151 = vunpack.c.l.b16 %v114
    %v152 = vunpack.c.l.b16 %v115
    %v153 = vunpack.c.l.b16 %v116
    %v154 = vpack.c.b16 %v139, %v138
    %v155 = vpack.c.b16 %v141, %v140
    %v156 = vpack.c.b16 %v143, %v142
    %v157 = vpack.c.b16 %v145, %v144
    %v158 = vpack.c.b16 %v147, %v146
    %v159 = vpack.c.b16 %v149, %v148
    %v160 = vpack.c.b16 %v151, %v150
    %v161 = vpack.c.b16 %v153, %v152
    %170 = vmatprep.subr.bf16.mxu0 0
    %171 = vmatpush1.bf16.msra.mxu0 %v154
    %172 = vmatprep.subr.bf16.mxu0 0
    %173 = vmatpush1.bf16.msra.mxu0 %v155
    %174 = vmatprep.subr.bf16.mxu0 0
    %175 = vmatpush1.bf16.msra.mxu0 %v156
    %176 = vmatprep.subr.bf16.mxu0 0
    %177 = vmatpush1.bf16.msra.mxu0 %v157
    %178 = vmatprep.subr.bf16.mxu0 0
    %179 = vmatpush1.bf16.msra.mxu0 %v158
    %180 = vmatprep.subr.bf16.mxu0 0
    %181 = vmatpush1.bf16.msra.mxu0 %v159
    %182 = vmatprep.subr.bf16.mxu0 0
    %183 = vmatpush1.bf16.msra.mxu0 %v160
    %184 = vmatprep.subr.bf16.mxu0 0
    %185 = vmatpush1.bf16.msra.mxu0 %v161
    %186 = vmatprep.subr.bf16.mxu0 0
    %187 = vmatpush1.bf16.msra.mxu0 0
    %188 = vmatprep.subr.bf16.mxu0 0
    %189 = vmatpush1.bf16.msra.mxu0 0
    %190 = vmatprep.subr.bf16.mxu0 0
    %191 = vmatpush1.bf16.msra.mxu0 0
    %192 = vmatprep.subr.bf16.mxu0 0
    %193 = vmatpush1.bf16.msra.mxu0 0
    %194 = vmatprep.subr.bf16.mxu0 0
    %195 = vmatpush1.bf16.msra.mxu0 0
    %196 = vmatprep.subr.bf16.mxu0 0
    %197 = vmatpush1.bf16.msra.mxu0 0
    %198 = vmatprep.subr.bf16.mxu0 0
    %199 = vmatpush1.bf16.msra.mxu0 0
    %200 = vmatprep.subr.bf16.mxu0 0
    %201 = vmatpush1.bf16.msra.mxu0 0
    %202 = vmatprep.mubr.bf16.mxu0 0
    %203 = vmatmul.mubr.bf16.gmra.mrb[0].mxu0 %v100
    %v204 = vpop.f32.mrb[0].mxu0
    %v205 = vadd.f32 %v121, %v204
    %v206 = vpop.f32.mrb[0].mxu0
    %v207 = vpop.f32.mrb[0].mxu0
    %v208 = vpop.f32.mrb[0].mxu0
    %209 = vdwg.mxu0
    %v210 = vmax.f32 %v205, 0.0
    %v211 = vpack.c.bf16 %v210, %v210
    %v212 = vld [vmem:[%s3] sm:$0xf]
    %v213 = vld [vmem:[%s3 + $0x4] sm:$0xf]
    %v214 = vld [vmem:[%s3 + $0x8] sm:$0xf]
    %v215 = vld [vmem:[%s3 + $0xc] sm:$0xf]
    %v216 = vld [vmem:[%s3 + $0x10] sm:$0xf]
    %v217 = vld [vmem:[%s3 + $0x14] sm:$0xf]
    %v218 = vld [vmem:[%s3 + $0x18] sm:$0xf]
    %v219 = vld [vmem:[%s3 + $0x1c] sm:$0xf]
    %v220 = vld [vmem:[%s3 + $0x20] sm:$0xf]
    %v221 = vld [vmem:[%s3 + $0x24] sm:$0xf]
    %v222 = vld [vmem:[%s3 + $0x28] sm:$0xf]
    %v223 = vld [vmem:[%s3 + $0x2c] sm:$0xf]
    %v224 = vld [vmem:[%s3 + $0x30] sm:$0xf]
    %v225 = vld [vmem:[%s3 + $0x34] sm:$0xf]
    %v226 = vld [vmem:[%s3 + $0x38] sm:$0xf]
    %v227 = vld [vmem:[%s3 + $0x3c] sm:$0xf]
    %v228 = vld [vmem:[#allocation2] sm:$0x1]
    %v230 = vlaneseq
    %v231 = vshrl.u32 %v230, 7
    %v232 = vsub.s32 0, %v231
    %v233 = vrot.slane %v228, %v232
    %v251 = vunpack.c.l.b16 %v212
    %v252 = vunpack.c.l.b16 %v213
    %v253 = vunpack.c.l.b16 %v214
    %v254 = vunpack.c.l.b16 %v215
    %v255 = vunpack.c.l.b16 %v216
    %v256 = vunpack.c.l.b16 %v217
    %v257 = vunpack.c.l.b16 %v218
    %v258 = vunpack.c.l.b16 %v219
    %v259 = vunpack.c.l.b16 %v220
    %v260 = vunpack.c.l.b16 %v221
    %v261 = vunpack.c.l.b16 %v222
    %v262 = vunpack.c.l.b16 %v223
    %v263 = vunpack.c.l.b16 %v224
    %v264 = vunpack.c.l.b16 %v225
    %v265 = vunpack.c.l.b16 %v226
    %v266 = vunpack.c.l.b16 %v227
    %v267 = vpack.c.b16 %v252, %v251
    %v268 = vpack.c.b16 %v254, %v253
    %v269 = vpack.c.b16 %v256, %v255
    %v270 = vpack.c.b16 %v258, %v257
    %v271 = vpack.c.b16 %v260, %v259
    %v272 = vpack.c.b16 %v262, %v261
    %v273 = vpack.c.b16 %v264, %v263
    %v274 = vpack.c.b16 %v266, %v265
    %283 = vmatprep.subr.bf16.mxu0 0
    %284 = vmatpush1.bf16.msra.mxu0 %v267
    %285 = vmatprep.subr.bf16.mxu0 0
    %286 = vmatpush1.bf16.msra.mxu0 %v268
    %287 = vmatprep.subr.bf16.mxu0 0
    %288 = vmatpush1.bf16.msra.mxu0 %v269
    %289 = vmatprep.subr.bf16.mxu0 0
    %290 = vmatpush1.bf16.msra.mxu0 %v270
    %291 = vmatprep.subr.bf16.mxu0 0
    %292 = vmatpush1.bf16.msra.mxu0 %v271
    %293 = vmatprep.subr.bf16.mxu0 0
    %294 = vmatpush1.bf16.msra.mxu0 %v272
    %295 = vmatprep.subr.bf16.mxu0 0
    %296 = vmatpush1.bf16.msra.mxu0 %v273
    %297 = vmatprep.subr.bf16.mxu0 0
    %298 = vmatpush1.bf16.msra.mxu0 %v274
    %299 = vmatprep.subr.bf16.mxu0 0
    %300 = vmatpush1.bf16.msra.mxu0 0
    %301 = vmatprep.subr.bf16.mxu0 0
    %302 = vmatpush1.bf16.msra.mxu0 0
    %303 = vmatprep.subr.bf16.mxu0 0
    %304 = vmatpush1.bf16.msra.mxu0 0
    %305 = vmatprep.subr.bf16.mxu0 0
    %306 = vmatpush1.bf16.msra.mxu0 0
    %307 = vmatprep.subr.bf16.mxu0 0
    %308 = vmatpush1.bf16.msra.mxu0 0
    %309 = vmatprep.subr.bf16.mxu0 0
    %310 = vmatpush1.bf16.msra.mxu0 0
    %311 = vmatprep.subr.bf16.mxu0 0
    %312 = vmatpush1.bf16.msra.mxu0 0
    %313 = vmatprep.subr.bf16.mxu0 0
    %314 = vmatpush1.bf16.msra.mxu0 0
    %315 = vmatprep.mubr.bf16.mxu0 0
    %316 = vmatmul.mubr.bf16.gmra.mrb[0].mxu0 %v211
    %v317 = vpop.f32.mrb[0].mxu0
    %v318 = vadd.f32 %v233, %v317
    %v319 = vpop.f32.mrb[0].mxu0
    %v320 = vpop.f32.mrb[0].mxu0
    %v321 = vpop.f32.mrb[0].mxu0
    %322 = vdwg.mxu0
    %vm323 = vcmask 130048
    %324 = vst.msk [vmem:[#allocation5] sm:$0xff] %vm323, %v318
    // Predicated region
    $region30: #{general_nn_forward.1} parent=1 // pred_check
      _
    $region31: #{general_nn_forward.1} parent=1 // pred_check_branch
      %326 = sbr.rel (0) target = $region33
    $region32: #{general_nn_forward.1} parent=1 // pred_region
      %s328 = ssub.s32 128, 128
      %329 = vsyncadd [#allocation4], %s328
      %s331 = sshll.u32 [#allocation5], 4
      %s332 = int_to_ptr.vmem [resolvable:$true] %s331
      %334 = dma.vmem_to_hbm [thread:$0]  %s332, 128, %s6, [#allocation4]
    $region33: #{general_nn_forward.1} parent=1 // pred_fallthru
      _
    // Predicated region
    $region34: #{general_nn_forward.1} parent=1 // pred_check
      _
    $region35: #{general_nn_forward.1} parent=1 // pred_check_branch
      %336 = sbr.rel (0) target = $region37
    $region36: #{general_nn_forward.1} parent=1 // pred_region
      %337 = dma.done [#allocation4], 128
    $region37: #{general_nn_forward.1} parent=1 // pred_fallthru
      _
    %338 = vsyncpa [#allocation3], 1
    %339 = vsyncpa [#allocation4], 1

</llo_original>
